<compile_context>
chip_gen: v7x
topology: tpu7x:2x2x1
jax: 0.10.0
libtpu: 0.0.40
codegen_flags: <defaults>
</compile_context>

<pallas_src>
import jax
import jax.numpy as jnp
from jax.experimental import pallas as pl
from jax.experimental.pallas import tpu as pltpu

_LANE = 128
_SUB = 8
# ~4 MiB per block: (in + out) x double-buffer ~= 16 MiB << 32 MiB (v7x-safe).
_MAX_BLOCK_BYTES = 4 * 1024 * 1024


def _copy_kernel(x_ref, o_ref):
    # Pure passthrough — the whole forward is `return x`.
    o_ref[...] = x_ref[...]


def _choose_2d_layout(n, itemsize):
    """Pick a lane-dense (rows, width) reshape and a block row count.

    Requires n % (8 * 128) == 0. Returns (rows, width, block_rows) with
    width a multiple of 128, rows % block_rows == 0, block_rows % 8 == 0.
    """
    width = _LANE
    for cand in (4096, 2048, 1024, 512, 256, 128):
        if n % cand == 0 and (n // cand) % _SUB == 0:
            width = cand
            break
    rows = n // width

    rows_cap = max(_SUB, _MAX_BLOCK_BYTES // (width * itemsize))
    block_rows = _SUB
    cand = min(rows, (rows_cap // _SUB) * _SUB)
    while cand >= _SUB:
        if rows % cand == 0:
            block_rows = cand
            break
        cand -= _SUB
    return rows, width, block_rows


def _identity_2d(x2d, block_rows):
    rows, width = x2d.shape
    grid = (rows // block_rows,)
    return pl.pallas_call(
        _copy_kernel,
        out_shape=jax.ShapeDtypeStruct((rows, width), x2d.dtype),
        grid=grid,
        in_specs=[pl.BlockSpec((block_rows, width), lambda i: (i, 0))],
        out_specs=pl.BlockSpec((block_rows, width), lambda i: (i, 0)),
        # Alias input -> output: removes the second HBM buffer for the copy.
        input_output_aliases={0: 0},
        compiler_params=pltpu.CompilerParams(
            dimension_semantics=("parallel",),
        ),
    )(x2d)


@jax.jit
def mymodel1_forward(x):
    """Identity forward of mymodel1 (forward(x) -> x)."""
    orig_shape = x.shape
    n = x.size
    itemsize = jnp.dtype(x.dtype).itemsize
    tile = _LANE * _SUB

    if n % tile == 0:
        # Common path: no padding, no slicing, no dtype round-trip.
        rows, width, block_rows = _choose_2d_layout(n, itemsize)
        out2d = _identity_2d(x.reshape(rows, width), block_rows)
        return out2d.reshape(orig_shape)

    # Ragged fallback (element count not a multiple of 8*128): pad to a full
    # tile, run the same tiled copy, slice back. Lossless; only hit for odd sizes.
    n_pad = ((n + tile - 1) // tile) * tile
    flat = jnp.pad(x.reshape(-1), (0, n_pad - n))
    rows, width, block_rows = _choose_2d_layout(n_pad, itemsize)
    out2d = _identity_2d(flat.reshape(rows, width), block_rows)
    return out2d.reshape(-1)[:n].reshape(orig_shape)


if __name__ == "__main__":
    key = jax.random.PRNGKey(0)
    # Small NCHW input consistent with a typical conv-style module input.
    x = jax.random.normal(key, (2, 4, 16, 16), dtype=jnp.float32)

    y = mymodel1_forward(x)
    y = jax.block_until_ready(y)

    assert y.shape == x.shape
    assert y.dtype == x.dtype
    assert bool(jnp.array_equal(y, x))
    print("KERNEL_OK")
</pallas_src>

<mosaic_0001>
module attributes {stable_mosaic.version = 11 : i64} {
  func.func @_copy_kernel(%arg0: i32, %arg1: memref<8x256xf32, #tpu.memory_space<vmem>>, %arg2: memref<8x256xf32, #tpu.memory_space<vmem>>) attributes {dimension_semantics = [#tpu.dimension_semantics<parallel>], iteration_bounds = array<i64: 1>, scalar_prefetch = 0 : i64, scratch_operands = 0 : i64, tpu.core_type = #tpu.core_type<tc>, window_params = [{transform_indices = @transform_0, window_bounds = array<i64: 8, 256>}, {transform_indices = @transform_1, window_bounds = array<i64: 8, 256>}]} {
    %c0 = arith.constant 0 : index
    %c0_0 = arith.constant 0 : index
    %0 = vector.load %arg1[%c0, %c0_0] : memref<8x256xf32, #tpu.memory_space<vmem>>, vector<8x256xf32>
    %c0_1 = arith.constant 0 : index
    %c0_2 = arith.constant 0 : index
    %1 = vector.load %arg2[%c0_1, %c0_2] : memref<8x256xf32, #tpu.memory_space<vmem>>, vector<8x256xf32>
    tpu.vector_store %arg2[%c0_1, %c0_2], %0 {strides = array<i32>} : memref<8x256xf32, #tpu.memory_space<vmem>>, vector<8x256xf32>,
    return
  }
  func.func @transform_0(%arg0: i32) -> (i32, i32) {
    %c0_i32 = arith.constant 0 : i32
    %c0_i32_0 = arith.constant 0 : i32
    return %arg0, %c0_i32 : i32, i32
  }
  func.func @transform_1(%arg0: i32) -> (i32, i32) {
    %c0_i32 = arith.constant 0 : i32
    %c0_i32_0 = arith.constant 0 : i32
    return %arg0, %c0_i32 : i32, i32
  }
}

</mosaic_0001>

<llo_original>
// kernel: mymodel1_forward.1
$region0: #{mymodel1_forward.1}
  #allocation0 [shape = 'u32[]', space=smem, size = 0x4, offset = 0x4, fixed_abs, tag = 'smem constant byte address 0x4 - core index']
  #allocation1 [shape = 'u32[144,128]{1,0:T(1,128)}', space=vmem, size = 0x12000, scoped, tag = 'internal scratch']
  %s0 = inlined_call_operand.vmem [shape: f32[8,256], index: 0, kind: input, shape index: {}, may-alias: {0,1}]
  %s1 = inlined_call_operand.vmem [shape: f32[8,256], index: 1, kind: output, shape index: {}, may-alias: {0,1}]
  %s2 = sld [smem:[#allocation0]]
  $region14: #{mymodel1_forward.1} parent=0
    _
  %s4 = ssub.s32 1, %s2
  %s5 = scalar_select 0, %s4, %s2
  // Predicated region
  $region2: #{mymodel1_forward.1} parent=0 // pred_check
    _
  $region3: #{mymodel1_forward.1} parent=0 // pred_check_branch
    %7 = sbr.rel (0) target = $region5
  $region4: #{mymodel1_forward.1} parent=0 // pred_region
    _
  $region5: #{mymodel1_forward.1} parent=0 // pred_fallthru
    _
  %v8 = vld [vmem:[%s0] sm:$0xff]
  %v9 = vld [vmem:[%s0 + $0x8] sm:$0xff]
  %10 = vst [vmem:[%s1] sm:$0xff] %v8
  %11 = vst [vmem:[%s1 + $0x8] sm:$0xff] %v9
  // Predicated region
  $region6: #{mymodel1_forward.1} parent=0 // pred_check
    _
  $region7: #{mymodel1_forward.1} parent=0 // pred_check_branch
    %13 = sbr.rel (0) target = $region9
  $region8: #{mymodel1_forward.1} parent=0 // pred_region
    _
  $region9: #{mymodel1_forward.1} parent=0 // pred_fallthru
    _
  // Predicated region
  $region10: #{mymodel1_forward.1} parent=0 // pred_check
    _
  $region11: #{mymodel1_forward.1} parent=0 // pred_check_branch
    %15 = sbr.rel (0) target = $region13
  $region12: #{mymodel1_forward.1} parent=0 // pred_region
    _
  $region13: #{mymodel1_forward.1} parent=0 // pred_fallthru
    _

</llo_original>
